<compile_context>
chip_gen: v5e
topology: v5e:2x2
jax: 0.10.0
libtpu: 0.0.40
codegen_flags: <defaults>
</compile_context>

<pallas_src>
import jax
import jax.numpy as jnp
from jax.experimental import pallas as pl
from jax.experimental.pallas import tpu as pltpu

LANES = 128        # lane width of a vreg
ACC_ROWS = 32      # accumulator rows (4 vregs); also the tile-row granularity
CHUNK_ROWS = 512   # rows per in-kernel sub-chunk (256 KiB f32) -> small temps


def _round_up(a, b):
    return ((a + b - 1) // b) * b


def _tpu_tuning(itemsize):
    """(max_tile_rows, num_tensorcores) for the local chip generation."""
    try:
        kind = jax.devices()[0].device_kind.lower()
    except Exception:  # pragma: no cover - e.g. no device available at trace
        kind = ""
    if ("v5 lite" in kind) or ("v5e" in kind) or ("v5lite" in kind):
        tile_bytes, num_tc = 2 * 1024 * 1024, 1   # v5e: 16 MiB scoped VMEM default
    elif ("v7" in kind) or ("tpu7" in kind) or ("7x" in kind):
        tile_bytes, num_tc = 4 * 1024 * 1024, 2   # v7x: 2 TCs share HBM
    else:
        tile_bytes, num_tc = 4 * 1024 * 1024, 1   # v6e / default: 1 TC, 32 MiB
    rows = (tile_bytes // (LANES * itemsize)) // ACC_ROWS * ACC_ROWS
    return max(ACC_ROWS, rows), num_tc


def _make_kernel(n_elements, tile_rows, steps_per_slice):
    # All geometry is static at trace time, so no scalar prefetch is needed.
    full_rows = n_elements // LANES      # rows that are entirely valid
    rem_lanes = n_elements % LANES       # valid lanes in the final partial row

    def _accumulate(x_ref, acc_ref, base_row, masked):
        # Static (trace-time) chunk loop: keeps live temps to <= CHUNK_ROWS
        # rows so EUP log pushes interleave with VPU adds.
        r0 = 0
        while r0 < tile_rows:
            c = min(CHUNK_ROWS, tile_rows - r0)
            xb = x_ref[pl.ds(r0, c), :].astype(jnp.float32)
            if masked:
                # Mask BEFORE the log so pad / out-of-bounds data contributes
                # log(1) == 0 regardless of its value.
                ridx = jax.lax.broadcasted_iota(jnp.int32, (c, LANES), 0)
                cidx = jax.lax.broadcasted_iota(jnp.int32, (c, LANES), 1)
                grow = base_row + (r0 + ridx)
                valid = (grow < full_rows) | (
                    (grow == full_rows) & (cidx < rem_lanes))
                xb = jnp.where(valid, xb, 1.0)
            vals = jnp.log(xb)                         # EUP
            c_main = (c // ACC_ROWS) * ACC_ROWS
            if c_main:
                acc_ref[...] += jnp.sum(
                    vals[:c_main].reshape(-1, ACC_ROWS, LANES), axis=0)
            if c_main < c:                             # tiny single-block tails
                rem = c - c_main
                acc_ref[pl.ds(0, rem), :] += vals[c_main:]
            r0 += c

    def kernel(x_ref, o_ref, acc_ref):
        p = pl.program_id(0)
        k = pl.program_id(1)

        @pl.when(k == 0)
        def _():
            acc_ref[...] = jnp.zeros_like(acc_ref)

        base_row = (p * steps_per_slice + k) * tile_rows

        # Interior blocks: fully valid, no mask ops on the hot path.
        @pl.when(base_row + tile_rows <= full_rows)
        def _():
            _accumulate(x_ref, acc_ref, base_row, masked=False)

        # Tail block(s): mask the lane/row remainder and any over-coverage.
        @pl.when(base_row + tile_rows > full_rows)
        def _():
            _accumulate(x_ref, acc_ref, base_row, masked=True)

        # One XLU reduce of the vector accumulator per slice, at the end.
        @pl.when(k == pl.num_programs(1) - 1)
        def _():
            o_ref[...] = jnp.sum(acc_ref[...]).reshape(1, 1, 1)

    return kernel


def log_utility_loss(x):
    """Pallas equivalent of LogUtilityLoss.forward: -mean(log(x))."""
    n = int(x.size)
    if n == 0:
        return jnp.float32(jnp.nan)

    flat = jnp.ravel(x)                       # free for a contiguous buffer
    itemsize = jnp.dtype(x.dtype).itemsize
    max_tile_rows, num_tc = _tpu_tuning(itemsize)

    rows = pl.cdiv(n, LANES)
    padded = rows * LANES
    if padded != n:
        # Only lane alignment (<= 127 elements). The tail is masked in-kernel,
        # so the pad value never reaches the sum.
        # TODO(synk): for huge non-128-multiple inputs this is still one extra
        # HBM round-trip; avoiding it entirely needs manual HBM DMA.
        flat = jnp.pad(flat, (0, padded - n), constant_values=1)
    slab = flat.reshape(rows, LANES)          # lane-dense [rows, 128] view

    if rows <= max_tile_rows:
        # Single block equal to the full array dims (always a legal BlockSpec).
        num_parallel, steps_per_slice, tile_rows = 1, 1, rows
    else:
        steps_total = pl.cdiv(rows, max_tile_rows)
        num_parallel = 2 if (num_tc >= 2 and steps_total >= 2) else 1
        steps_per_slice = pl.cdiv(steps_total, num_parallel)
        tile_rows = _round_up(
            pl.cdiv(rows, num_parallel * steps_per_slice), ACC_ROWS)

    kernel = _make_kernel(n, tile_rows, steps_per_slice)

    partial = pl.pallas_call(
        kernel,
        out_shape=jax.ShapeDtypeStruct((num_parallel, 1, 1), jnp.float32),
        grid_spec=pltpu.PrefetchScalarGridSpec(
            num_scalar_prefetch=0,
            grid=(num_parallel, steps_per_slice),
            in_specs=[
                pl.BlockSpec(
                    (tile_rows, LANES),
                    lambda p, k: (p * steps_per_slice + k, 0),
                )
            ],
            out_specs=pl.BlockSpec((1, 1, 1), lambda p, k: (p, 0, 0)),
            scratch_shapes=[pltpu.VMEM((ACC_ROWS, LANES), jnp.float32)],
        ),
        compiler_params=pltpu.CompilerParams(
            dimension_semantics=("parallel", "arbitrary")
        ),
    )(slab)

    # -sum(log(x)) / n  over the ORIGINAL element count, in the wrapper.
    total = jnp.sum(partial)
    return -(total / jnp.float32(n))


if __name__ == "__main__":
    def ref_loss(v):
        return -jnp.mean(jnp.log(v))

    key = jax.random.PRNGKey(0)
    k1, k2, k3 = jax.random.split(key, 3)

    # Small NCHW-like, lane-aligned input (2*4*16*16 = 2048 elements).
    x1 = jax.random.uniform(k1, (2, 4, 16, 16), jnp.float32,
                            minval=0.1, maxval=1.0)
    l1 = log_utility_loss(x1)
    jax.block_until_ready(l1)
    assert jnp.allclose(l1, ref_loss(x1), rtol=1e-5, atol=1e-6), (l1, ref_loss(x1))

    # Non-lane-aligned element count -> exercises the masked-tail path.
    x2 = jax.random.uniform(k2, (3, 5, 7, 11), jnp.float32,
                            minval=0.1, maxval=1.0)
    l2 = log_utility_loss(x2)
    jax.block_until_ready(l2)
    assert jnp.allclose(l2, ref_loss(x2), rtol=1e-5, atol=1e-6), (l2, ref_loss(x2))

    # Larger input -> exercises the multi-step tiled/pipelined path.
    x3 = jax.random.uniform(k3, (8, 64, 48, 48), jnp.float32,
                            minval=0.1, maxval=1.0)
    l3 = log_utility_loss(x3)
    jax.block_until_ready(l3)
    assert jnp.allclose(l3, ref_loss(x3), rtol=1e-4, atol=1e-5), (l3, ref_loss(x3))

    print("KERNEL_OK")
</pallas_src>

<mosaic_0001>
module attributes {stable_mosaic.version = 11 : i64} {
  func.func @kernel(%arg0: i32, %arg1: i32, %arg2: memref<16x128xf32, #tpu.memory_space<vmem>>, %arg3: memref<1x1x1xf32, #tpu.memory_space<vmem>>, %arg4: memref<32x128xf32, #tpu.memory_space<vmem>>) attributes {dimension_semantics = [#tpu.dimension_semantics<parallel>, #tpu.dimension_semantics<arbitrary>], iteration_bounds = array<i64: 1, 1>, scalar_prefetch = 0 : i64, scratch_operands = 1 : i64, tpu.core_type = #tpu.core_type<tc>, window_params = [{transform_indices = @transform_0, window_bounds = array<i64: 16, 128>}, {transform_indices = @transform_1, window_bounds = array<i64: 1, 1, 1>}]} {
    %c0_i32 = arith.constant 0 : i32
    %0 = arith.cmpi eq, %arg1, %c0_i32 : i32
    %1 = arith.extui %0 : i1 to i32
    %c0_i32_0 = arith.constant 0 : i32
    %2 = arith.cmpi ne, %1, %c0_i32_0 : i32
    scf.if %2 {
      %cst = arith.constant 0.000000e+00 : f32
      %17 = vector.broadcast %cst : f32 to vector<32x128xf32>
      %c0 = arith.constant 0 : index
      %c0_9 = arith.constant 0 : index
      %18 = vector.load %arg4[%c0, %c0_9] : memref<32x128xf32, #tpu.memory_space<vmem>>, vector<32x128xf32>
      tpu.vector_store %arg4[%c0, %c0_9], %17 {strides = array<i32>} : memref<32x128xf32, #tpu.memory_space<vmem>>, vector<32x128xf32>,
    } else {
    }
    %c1_i32 = arith.constant 1 : i32
    %3 = arith.muli %arg0, %c1_i32 : i32
    %4 = arith.addi %3, %arg1 : i32
    %c16_i32 = arith.constant 16 : i32
    %5 = arith.muli %4, %c16_i32 : i32
    %c16_i32_1 = arith.constant 16 : i32
    %6 = arith.addi %5, %c16_i32_1 : i32
    %c16_i32_2 = arith.constant 16 : i32
    %7 = arith.cmpi sle, %6, %c16_i32_2 : i32
    %8 = arith.extui %7 : i1 to i32
    %c0_i32_3 = arith.constant 0 : i32
    %9 = arith.cmpi ne, %8, %c0_i32_3 : i32
    scf.if %9 {
      %c0 = arith.constant 0 : index
      %c0_9 = arith.constant 0 : index
      %17 = vector.load %arg2[%c0, %c0_9] : memref<16x128xf32, #tpu.memory_space<vmem>>, vector<16x128xf32>
      %18 = math.log %17 : vector<16x128xf32>
      %c0_10 = arith.constant 0 : index
      %c0_11 = arith.constant 0 : index
      %19 = vector.load %arg4[%c0_10, %c0_11] : memref<32x128xf32, #tpu.memory_space<vmem>>, vector<16x128xf32>
      %20 = arith.addf %19, %18 : vector<16x128xf32>
      %c0_12 = arith.constant 0 : index
      %c0_13 = arith.constant 0 : index
      %21 = vector.load %arg4[%c0_12, %c0_13] : memref<32x128xf32, #tpu.memory_space<vmem>>, vector<16x128xf32>
      tpu.vector_store %arg4[%c0_12, %c0_13], %20 {strides = array<i32>} : memref<32x128xf32, #tpu.memory_space<vmem>>, vector<16x128xf32>,
    } else {
    }
    %c16_i32_4 = arith.constant 16 : i32
    %10 = arith.addi %5, %c16_i32_4 : i32
    %c16_i32_5 = arith.constant 16 : i32
    %11 = arith.cmpi sgt, %10, %c16_i32_5 : i32
    %12 = arith.extui %11 : i1 to i32
    %c0_i32_6 = arith.constant 0 : i32
    %13 = arith.cmpi ne, %12, %c0_i32_6 : i32
    scf.if %13 {
      %c0 = arith.constant 0 : index
      %c0_9 = arith.constant 0 : index
      %17 = vector.load %arg2[%c0, %c0_9] : memref<16x128xf32, #tpu.memory_space<vmem>>, vector<16x128xf32>
      %18 = tpu.iota {dimensions = array<i32: 0>} : vector<16x128xi32>
      %19 = tpu.iota {dimensions = array<i32: 1>} : vector<16x128xi32>
      %c0_i32_10 = arith.constant 0 : i32
      %20 = vector.broadcast %c0_i32_10 : i32 to vector<16x128xi32>
      %21 = arith.addi %20, %18 : vector<16x128xi32>
      %22 = vector.broadcast %5 : i32 to vector<16x128xi32>
      %23 = arith.addi %22, %21 : vector<16x128xi32>
      %c16_i32_11 = arith.constant 16 : i32
      %24 = vector.broadcast %c16_i32_11 : i32 to vector<16x128xi32>
      %25 = arith.cmpi slt, %23, %24 : vector<16x128xi32>
      %c16_i32_12 = arith.constant 16 : i32
      %26 = vector.broadcast %c16_i32_12 : i32 to vector<16x128xi32>
      %27 = arith.cmpi eq, %23, %26 : vector<16x128xi32>
      %c0_i32_13 = arith.constant 0 : i32
      %28 = vector.broadcast %c0_i32_13 : i32 to vector<16x128xi32>
      %29 = arith.cmpi slt, %19, %28 : vector<16x128xi32>
      %30 = arith.andi %27, %29 : vector<16x128xi1>
      %31 = arith.ori %25, %30 : vector<16x128xi1>
      %cst = arith.constant 1.000000e+00 : f32
      %32 = vector.broadcast %cst : f32 to vector<16x128xf32>
      %33 = arith.select %31, %17, %32 : vector<16x128xi1>, vector<16x128xf32>
      %34 = math.log %33 : vector<16x128xf32>
      %c0_14 = arith.constant 0 : index
      %c0_15 = arith.constant 0 : index
      %35 = vector.load %arg4[%c0_14, %c0_15] : memref<32x128xf32, #tpu.memory_space<vmem>>, vector<16x128xf32>
      %36 = arith.addf %35, %34 : vector<16x128xf32>
      %c0_16 = arith.constant 0 : index
      %c0_17 = arith.constant 0 : index
      %37 = vector.load %arg4[%c0_16, %c0_17] : memref<32x128xf32, #tpu.memory_space<vmem>>, vector<16x128xf32>
      tpu.vector_store %arg4[%c0_16, %c0_17], %36 {strides = array<i32>} : memref<32x128xf32, #tpu.memory_space<vmem>>, vector<16x128xf32>,
    } else {
    }
    %c0_i32_7 = arith.constant 0 : i32
    %14 = arith.cmpi eq, %arg1, %c0_i32_7 : i32
    %15 = arith.extui %14 : i1 to i32
    %c0_i32_8 = arith.constant 0 : i32
    %16 = arith.cmpi ne, %15, %c0_i32_8 : i32
    scf.if %16 {
      %c0 = arith.constant 0 : index
      %c0_9 = arith.constant 0 : index
      %17 = vector.load %arg4[%c0, %c0_9] : memref<32x128xf32, #tpu.memory_space<vmem>>, vector<32x128xf32>
      %18 = vector.shape_cast %17 : vector<32x128xf32> to vector<1x32x128xf32>
      %cst = arith.constant dense<0.000000e+00> : vector<1xf32>
      %19 = vector.multi_reduction <add>, %18, %cst [1, 2] : vector<1x32x128xf32> to vector<1xf32>
      %20 = vector.shape_cast %19 : vector<1xf32> to vector<1x1x1xf32>
      %21 = vector.extract %20[0, 0, 0] : f32 from vector<1x1x1xf32>
      %22 = vector.broadcast %21 : f32 to vector<1x1x1xf32>
      %c0_10 = arith.constant 0 : index
      %c0_11 = arith.constant 0 : index
      %c0_12 = arith.constant 0 : index
      %23 = vector.load %arg3[%c0_10, %c0_11, %c0_12] : memref<1x1x1xf32, #tpu.memory_space<vmem>>, vector<1x1x1xf32>
      tpu.vector_store %arg3[%c0_10, %c0_11, %c0_12], %22 {strides = array<i32>} : memref<1x1x1xf32, #tpu.memory_space<vmem>>, vector<1x1x1xf32>,
    } else {
    }
    return
  }
  func.func @transform_0(%arg0: i32, %arg1: i32) -> (i32, i32) {
    %c1_i32 = arith.constant 1 : i32
    %0 = arith.muli %arg0, %c1_i32 : i32
    %1 = arith.addi %0, %arg1 : i32
    %c0_i32 = arith.constant 0 : i32
    %c0_i32_0 = arith.constant 0 : i32
    return %1, %c0_i32 : i32, i32
  }
  func.func @transform_1(%arg0: i32, %arg1: i32) -> (i32, i32, i32) {
    %c0_i32 = arith.constant 0 : i32
    %c0_i32_0 = arith.constant 0 : i32
    %c0_i32_1 = arith.constant 0 : i32
    return %arg0, %c0_i32, %c0_i32_0 : i32, i32, i32
  }
}

</mosaic_0001>

<llo_original>
// kernel: tpu_custom_call.1
$region0: #{tpu_custom_call.1}
  #allocation0 [shape = 'u32[]', space=smem, size = 0x4, offset = 0x4, fixed_abs, tag = 'smem constant byte address 0x4 - core index']
  #allocation1 [shape = 'u32[72,128]{1,0:T(1,128)}', space=vmem, size = 0x9000, scoped, tag = 'internal scratch']
  #allocation2 [shape = 'f32[32,128]{1,0:T(8,128)}', space=vmem, size = 0x4000, scoped, tag = 'scratch operand']
  %s0 = inlined_call_operand.hbm [shape: f32[16,128], index: 0, kind: input, shape index: {}]
  %s1 = inlined_call_operand.hbm [shape: f32[1,1,1], index: 1, kind: output, shape index: {}]
  %s2 = sld [smem:[#allocation0]]
  $region34: #{tpu_custom_call.1} parent=0
    _
  %s4 = ssub.s32 1, %s2
  %s5 = scalar_select 0, %s4, %s2
  $region1: #{tpu_custom_call.1} parent=0
    #allocation3 [shape = 'u8[8192]{0}', space=vmem, size = 0x2000, scoped, tag = 'input window, operand 0, single buffered']
    #allocation4 [shape = 's32[1]{0}', space=sflag, size = 0x4, scoped, tag = 'scoped memory for tpu_custom_call.1']
    #allocation5 [shape = 's32[1]{0}', space=sflag, size = 0x4, scoped, tag = 'scoped memory for tpu_custom_call.1']
    #allocation6 [shape = 'u8[512]{0}', space=vmem, size = 0x400, scoped, tag = 'output window, operand 0, single buffered']
    %6 = vsyncpa [#allocation4], 0
    %7 = vsyncpa [#allocation5], 0
    // Predicated region
    $region2: #{tpu_custom_call.1} parent=1 // pred_check
      _
    $region3: #{tpu_custom_call.1} parent=1 // pred_check_branch
      %9 = sbr.rel (0) target = $region5
    $region4: #{tpu_custom_call.1} parent=1 // pred_region
      %s10 = sadd.s32 0, 0
      %s11 = smul.u32 2, %s10
      %13 = vsyncadd [#allocation4], 0
      %s14 = smul.addr %s11, 8
      %s15 = scalar_lea.hbm %s0, %s14
      %s16 = sshll.u32 %s15, 4
      %s17 = int_to_ptr.hbm [resolvable:$true] %s16
      %s18 = sshll.u32 [#allocation3], 4
      %s19 = int_to_ptr.vmem [resolvable:$true] %s18
      %24 = dma.hbm_to_vmem [thread:$0]  %s17, 256, %s19, [#allocation4], 128, 128, 8
    $region5: #{tpu_custom_call.1} parent=1 // pred_fallthru
      _
    // Predicated region
    $region6: #{tpu_custom_call.1} parent=1 // pred_check
      _
    $region7: #{tpu_custom_call.1} parent=1 // pred_check_branch
      %26 = sbr.rel (0) target = $region9
    $region8: #{tpu_custom_call.1} parent=1 // pred_region
      %28 = dma.done [#allocation4], 256
    $region9: #{tpu_custom_call.1} parent=1 // pred_fallthru
      _
    %s29 = sadd.s32 0, 0
    %s30 = smul.u32 2, %s29
    %p31 = scmp.eq.s32.totalorder 0, 0
    // Predicated region
    $region10: #{tpu_custom_call.1} parent=1 // pred_check
      %p32 = pneg %p31
    $region11: #{tpu_custom_call.1} parent=1 // pred_check_branch
      %34 = sbr.rel (%p32) target = $region13
    $region12: #{tpu_custom_call.1} parent=1 // pred_region
      %35 = vst [vmem:[#allocation2] sm:$0xff] 0.0
      %36 = vst [vmem:[#allocation2 + $0x8] sm:$0xff] 0.0
      %37 = vst [vmem:[#allocation2 + $0x10] sm:$0xff] 0.0
      %38 = vst [vmem:[#allocation2 + $0x18] sm:$0xff] 0.0
    $region13: #{tpu_custom_call.1} parent=1 // pred_fallthru
      _
    %s39 = sadd.s32 0, 0
    %s40 = smul.u32 %s39, 16
    %s41 = sadd.s32 %s40, 16
    %p42 = scmp.le.s32.totalorder %s41, 16
    // Predicated region
    $region14: #{tpu_custom_call.1} parent=1 // pred_check
      %p43 = pneg %p42
    $region15: #{tpu_custom_call.1} parent=1 // pred_check_branch
      %45 = sbr.rel (%p43) target = $region17
    $region16: #{tpu_custom_call.1} parent=1 // pred_region
      %v46 = vld [vmem:[#allocation3] sm:$0xff]
      %v47 = vld [vmem:[#allocation3 + $0x8] sm:$0xff]
      %v48 = vlog2.pop %v46
      %v49 = vmul.f32 %v48, 0.6931472
      %v50 = vlog2.pop %v47
      %v51 = vmul.f32 %v50, 0.6931472
      %v52 = vld [vmem:[#allocation2] sm:$0xff]
      %v53 = vld [vmem:[#allocation2 + $0x8] sm:$0xff]
      %v54 = vadd.f32 %v52, %v49
      %v55 = vadd.f32 %v53, %v51
      %56 = vst [vmem:[#allocation2] sm:$0xff] %v54
      %57 = vst [vmem:[#allocation2 + $0x8] sm:$0xff] %v55
    $region17: #{tpu_custom_call.1} parent=1 // pred_fallthru
      _
    %p58 = scmp.gt.s32.totalorder %s41, 16
    // Predicated region
    $region18: #{tpu_custom_call.1} parent=1 // pred_check
      %p59 = pneg %p58
    $region19: #{tpu_custom_call.1} parent=1 // pred_check_branch
      %61 = sbr.rel (%p59) target = $region21
    $region20: #{tpu_custom_call.1} parent=1 // pred_region
      %v62 = vld [vmem:[#allocation3] sm:$0xff]
      %v63 = vld [vmem:[#allocation3 + $0x8] sm:$0xff]
      %v64 = vlaneseq
      %v65 = vshrl.u32 %v64, 7
      %v66 = vadd.s32 %v65, 8
      %v67 = vlaneseq
      %v68 = vand.u32 %v67, 127
      %v69 = vstv %s40
      %v70 = vadd.s32 %v69, %v65
      %v71 = vadd.s32 %v69, %v66
      %vm72 = vcmp.lt.s32.totalorder %v70, 16
      %vm73 = vcmp.lt.s32.totalorder %v71, 16
      %vm74 = vcmp.eq.s32.totalorder %v70, 16
      %vm75 = vcmp.eq.s32.totalorder %v71, 16
      %vm76 = vcmp.lt.s32.totalorder %v68, 0
      %vm77 = vmand %vm74, %vm76
      %vm78 = vmand %vm75, %vm76
      %vm79 = vmor %vm72, %vm77
      %vm80 = vmor %vm73, %vm78
      %v81 = vsel %vm79, %v62, 1.0
      %v82 = vsel %vm80, %v63, 1.0
      %v83 = vlog2.pop %v81
      %v84 = vmul.f32 %v83, 0.6931472
      %v85 = vlog2.pop %v82
      %v86 = vmul.f32 %v85, 0.6931472
      %v87 = vld [vmem:[#allocation2] sm:$0xff]
      %v88 = vld [vmem:[#allocation2 + $0x8] sm:$0xff]
      %v89 = vadd.f32 %v87, %v84
      %v90 = vadd.f32 %v88, %v86
      %91 = vst [vmem:[#allocation2] sm:$0xff] %v89
      %92 = vst [vmem:[#allocation2 + $0x8] sm:$0xff] %v90
    $region21: #{tpu_custom_call.1} parent=1 // pred_fallthru
      _
    // Predicated region
    $region22: #{tpu_custom_call.1} parent=1 // pred_check
      %p93 = pneg %p31
    $region23: #{tpu_custom_call.1} parent=1 // pred_check_branch
      %95 = sbr.rel (%p93) target = $region25
    $region24: #{tpu_custom_call.1} parent=1 // pred_region
      %v96 = vld [vmem:[#allocation2] sm:$0xff]
      %v97 = vld [vmem:[#allocation2 + $0x8] sm:$0xff]
      %v98 = vld [vmem:[#allocation2 + $0x10] sm:$0xff]
      %v99 = vld [vmem:[#allocation2 + $0x18] sm:$0xff]
      %v100 = vadd.f32 %v96, %v97
      %v101 = vadd.f32 %v100, %v98
      %v102 = vadd.f32 %v101, %v99
      %103 = vadd.xlane.f32.xlu0 %v102
      %v104 = vpop.xlane.xlu0 %103
      %v105 = vrot.slane %v104, 4
      %v106 = vadd.f32 %v104, %v105
      %v107 = vrot.slane %v106, 2
      %v108 = vadd.f32 %v106, %v107
      %v109 = vrot.slane %v108, 1
      %v110 = vadd.f32 %v108, %v109
      %s111 = vtos %v110
      %v112 = vstv %s111
      %vm113 = vcmask 0
      %114 = vst.msk [vmem:[#allocation6] sm:$0x1] %vm113, %v112
    $region25: #{tpu_custom_call.1} parent=1 // pred_fallthru
      _
    // Predicated region
    $region26: #{tpu_custom_call.1} parent=1 // pred_check
      _
    $region27: #{tpu_custom_call.1} parent=1 // pred_check_branch
      %116 = sbr.rel (0) target = $region29
    $region28: #{tpu_custom_call.1} parent=1 // pred_region
      %118 = vsyncadd [#allocation5], 0
      %s120 = sshll.u32 [#allocation6], 4
      %s121 = int_to_ptr.vmem [resolvable:$true] %s120
      %s122 = sshll.u32 %s1, 4
      %s123 = int_to_ptr.hbm [resolvable:$true] %s122
      %125 = dma.vmem_to_hbm [thread:$0]  %s121, 16, %s123, [#allocation5]
    $region29: #{tpu_custom_call.1} parent=1 // pred_fallthru
      _
    // Predicated region
    $region30: #{tpu_custom_call.1} parent=1 // pred_check
      _
    $region31: #{tpu_custom_call.1} parent=1 // pred_check_branch
      %127 = sbr.rel (0) target = $region33
    $region32: #{tpu_custom_call.1} parent=1 // pred_region
      %129 = dma.done [#allocation5], 16
    $region33: #{tpu_custom_call.1} parent=1 // pred_fallthru
      _
    %130 = vsyncpa [#allocation4], 1
    %131 = vsyncpa [#allocation5], 1

</llo_original>
